<compile_context>
chip_gen: v6e
topology: v6e:2x2x1
jax: 0.10.0
libtpu: 0.0.40
codegen_flags: <defaults>
</compile_context>

<pallas_src>
import functools

import jax
import jax.numpy as jnp
from jax.experimental import pallas as pl
from jax.experimental.pallas import tpu as pltpu

HIDDEN = 128          # fc output width (fixed by the module)
NUM_DIRECTIONS = 4    # one-hot direction width (fixed by the module)
HEAD_PAD = 128        # fused (policy | value) head padded to a full lane tile

_VMEM_LIMIT_BYTES = 32 * 1024 * 1024   # one code path that also fits v7x
_IMG_TILE_BUDGET = 20 * 1024 * 1024    # VMEM budget for double-buffered image tiles
_TM_CAP = 256                          # keep >=2 grid steps for B > 256 (v7x megacore)


def _round_up(x, m):
    return (x + m - 1) // m * m


def _choose_tm(batch, k_img):
    """Pick the batch-tile size: multiple of 8, VMEM-budgeted from k_img,
    capped at 256, and split once more so mid-size batches still give >= 2
    grid steps (v7x has 2 TensorCores sharding the 'parallel' axis)."""
    bytes_per_row = 4 * k_img                               # f32 image stream
    tm_vmem = max(8, (_IMG_TILE_BUDGET // (2 * bytes_per_row)) // 8 * 8)
    tm = min(_TM_CAP, tm_vmem, _round_up(batch, 8))
    if batch >= 16 and pl.cdiv(batch, tm) < 2:
        tm = max(8, _round_up(pl.cdiv(batch, 2), 8))
    return tm


def _agent_kernel(img_ref, dir_ref, w1i_ref, w1d_ref, b1_ref, w2_ref, b2_ref,
                  out_ref):
    # fc, image part: cast the f32 image tile to bf16 in-register (no extra
    # HBM copy), accumulate in f32 on the MXU.
    h = jnp.dot(img_ref[...].astype(jnp.bfloat16), w1i_ref[...],
                preferred_element_type=jnp.float32)
    # fc, direction part: int32 (tm, 1) column -> 4 VPU mask-multiply-adds of
    # the w1_dir rows (equivalent to one_hot(direction) @ w1_dir).
    d = dir_ref[...]                                        # (tm, 1) int32
    w1d = w1d_ref[...]                                      # (4, HIDDEN) f32
    for k in range(NUM_DIRECTIONS):
        h = h + (d == k).astype(jnp.float32) * w1d[k]
    h = jnp.maximum(h + b1_ref[...], 0.0)                   # bias + ReLU (f32)
    # fused heads: Linear(128, action_dim + 1), zero-padded to 128 lanes.
    o = jnp.dot(h.astype(jnp.bfloat16), w2_ref[...],
                preferred_element_type=jnp.float32)
    out_ref[...] = o + b2_ref[...]


def prepare_params(params, action_dim):
    """One-time weight prep OUTSIDE the hot path: split fc weight into
    image/direction parts, fuse the two heads, zero-pad the head to 128
    lanes, cast matmul weights to bf16 (biases and the tiny w1_dir stay f32)."""
    assert action_dim + 1 <= HEAD_PAD, "fused head must fit in 128 lanes"

    w1, b1 = params["w1"], params["b1"]
    wp, bp = params["wp"], params["bp"]
    wv, bv = params["wv"], params["bv"]

    k_img = w1.shape[0] - NUM_DIRECTIONS
    # NOTE: k_img that is a multiple of 128 gives unmasked lane-dense loads;
    # non-multiples are still correct (full-extent block), just slightly slower.
    w1_img = w1[:k_img].astype(jnp.bfloat16)                 # (C*H*W, 128)
    w1_dir = w1[k_img:].astype(jnp.float32)                  # (4, 128), tiny

    out_w = action_dim + 1
    head_w = jnp.concatenate([wp, wv], axis=1).astype(jnp.bfloat16)
    head_b = jnp.concatenate([bp, bv], axis=1).astype(jnp.float32)
    w2 = jnp.zeros((HIDDEN, HEAD_PAD), jnp.bfloat16).at[:, :out_w].set(head_w)
    b2 = jnp.zeros((1, HEAD_PAD), jnp.float32).at[:, :out_w].set(head_b)

    return {
        "w1_img": w1_img,
        "w1_dir": w1_dir,
        "b1": b1.astype(jnp.float32).reshape(1, HIDDEN),
        "w2": w2,
        "b2": b2,
    }


@functools.partial(jax.jit, static_argnames=("action_dim",))
def agent_simple_forward(image, direction, prep, *, action_dim):
    """Pallas implementation of Agent_Simple.forward.

    image:     (B, C, H, W) float32  (NCHW, PyTorch convention)
    direction: (B,) or (B, 1) int    (values in [0, 4))
    prep:      output of prepare_params()
    returns:   (logits (B, action_dim), value (B, 1))
    """
    batch = image.shape[0]
    k_img = prep["w1_img"].shape[0]

    # Free reshape; dtype cast happens per-tile inside the kernel.
    image_flat = image.reshape(batch, -1)
    if direction.ndim == 1:
        direction = direction[:, None]
    direction = direction.astype(jnp.int32)                  # (B, 1)

    tm = _choose_tm(batch, k_img)
    grid = (pl.cdiv(batch, tm),)                             # ragged last block OK

    out = pl.pallas_call(
        _agent_kernel,
        out_shape=jax.ShapeDtypeStruct((batch, HEAD_PAD), jnp.float32),
        grid_spec=pltpu.PrefetchScalarGridSpec(
            num_scalar_prefetch=0,
            grid=grid,
            in_specs=[
                pl.BlockSpec((tm, k_img), lambda i: (i, 0)),           # image
                pl.BlockSpec((tm, 1), lambda i: (i, 0)),               # direction
                pl.BlockSpec((k_img, HIDDEN), lambda i: (0, 0)),       # W1_img
                pl.BlockSpec((NUM_DIRECTIONS, HIDDEN), lambda i: (0, 0)),
                pl.BlockSpec((1, HIDDEN), lambda i: (0, 0)),           # b1
                pl.BlockSpec((HIDDEN, HEAD_PAD), lambda i: (0, 0)),    # W2
                pl.BlockSpec((1, HEAD_PAD), lambda i: (0, 0)),         # b2
            ],
            out_specs=pl.BlockSpec((tm, HEAD_PAD), lambda i: (i, 0)),
        ),
        compiler_params=pltpu.CompilerParams(
            dimension_semantics=("parallel",),
            vmem_limit_bytes=_VMEM_LIMIT_BYTES,
        ),
    )(image_flat, direction, prep["w1_img"], prep["w1_dir"],
      prep["b1"], prep["w2"], prep["b2"])

    logits = out[:, :action_dim]
    value = out[:, action_dim:action_dim + 1]
    return logits, value


def init_params(key, input_dim, action_dim, hidden=HIDDEN):
    """Deterministic init matching nn.Linear shapes (stored transposed:
    (in_features, out_features)), uniform(-1/sqrt(fan_in), 1/sqrt(fan_in))."""
    ks = jax.random.split(key, 6)

    def lin(kw, kb, fan_in, fan_out):
        bound = 1.0 / jnp.sqrt(fan_in)
        w = jax.random.uniform(kw, (fan_in, fan_out), jnp.float32, -bound, bound)
        b = jax.random.uniform(kb, (1, fan_out), jnp.float32, -bound, bound)
        return w, b

    w1, b1 = lin(ks[0], ks[1], input_dim, hidden)     # fc
    wp, bp = lin(ks[2], ks[3], hidden, action_dim)    # policy_head
    wv, bv = lin(ks[4], ks[5], hidden, 1)             # value_head
    return {"w1": w1, "b1": b1, "wp": wp, "bp": bp, "wv": wv, "bv": bv}


def _reference_forward(image, direction, params, action_dim):
    """Pure-JAX f32 reference of the PyTorch module (for sanity checking)."""
    b = image.shape[0]
    x = image.reshape(b, -1)
    if direction.ndim == 2:
        direction = jnp.squeeze(direction, axis=-1)
    oh = jax.nn.one_hot(direction.astype(jnp.int32), NUM_DIRECTIONS,
                        dtype=jnp.float32)
    x = jnp.concatenate([x, oh], axis=1)
    h = jnp.maximum(x @ params["w1"] + params["b1"], 0.0)
    return h @ params["wp"] + params["bp"], h @ params["wv"] + params["bv"]


if __name__ == "__main__":
    key = jax.random.PRNGKey(0)
    k_image, k_dir, k_par = jax.random.split(key, 3)

    # Small shapes consistent with the module: image NCHW, 4 directions.
    B, C, H, W = 2, 4, 16, 16
    action_dim = 7
    input_dim = C * H * W + NUM_DIRECTIONS  # flattened image + one-hot dir

    image = jax.random.normal(k_image, (B, C, H, W), dtype=jnp.float32)
    direction = jax.random.randint(k_dir, (B,), 0, 4, dtype=jnp.int32)

    params = init_params(k_par, input_dim, action_dim)
    prep = prepare_params(params, action_dim)

    logits, value = agent_simple_forward(image, direction, prep,
                                         action_dim=action_dim)
    jax.block_until_ready((logits, value))

    assert logits.shape == (B, action_dim)
    assert value.shape == (B, 1)

    # Loose-tolerance check against the f32 reference (kernel uses bf16 MXU).
    ref_logits, ref_value = _reference_forward(image, direction, params,
                                               action_dim)
    assert jnp.allclose(logits, ref_logits, atol=5e-2, rtol=5e-2)
    assert jnp.allclose(value, ref_value, atol=5e-2, rtol=5e-2)

    print("KERNEL_OK")
</pallas_src>

<mosaic_0001>
module attributes {stable_mosaic.version = 11 : i64} {
  func.func @_agent_kernel(%arg0: i32, %arg1: memref<8x1024xf32, #tpu.memory_space<vmem>>, %arg2: memref<8x1xi32, #tpu.memory_space<vmem>>, %arg3: memref<1024x128xbf16, #tpu.memory_space<vmem>>, %arg4: memref<4x128xf32, #tpu.memory_space<vmem>>, %arg5: memref<1x128xf32, #tpu.memory_space<vmem>>, %arg6: memref<128x128xbf16, #tpu.memory_space<vmem>>, %arg7: memref<1x128xf32, #tpu.memory_space<vmem>>, %arg8: memref<8x128xf32, #tpu.memory_space<vmem>>) attributes {dimension_semantics = [#tpu.dimension_semantics<parallel>], iteration_bounds = array<i64: 1>, scalar_prefetch = 0 : i64, scratch_operands = 0 : i64, tpu.core_type = #tpu.core_type<tc>, window_params = [{transform_indices = @transform_0, window_bounds = array<i64: 8, 1024>}, {transform_indices = @transform_1, window_bounds = array<i64: 8, 1>}, {pipeline_mode = #tpu.pipeline_mode<synchronous>, transform_indices = @transform_2, window_bounds = array<i64: 1024, 128>}, {pipeline_mode = #tpu.pipeline_mode<synchronous>, transform_indices = @transform_3, window_bounds = array<i64: 4, 128>}, {pipeline_mode = #tpu.pipeline_mode<synchronous>, transform_indices = @transform_4, window_bounds = array<i64: 1, 128>}, {pipeline_mode = #tpu.pipeline_mode<synchronous>, transform_indices = @transform_5, window_bounds = array<i64: 128, 128>}, {pipeline_mode = #tpu.pipeline_mode<synchronous>, transform_indices = @transform_6, window_bounds = array<i64: 1, 128>}, {transform_indices = @transform_7, window_bounds = array<i64: 8, 128>}]} {
    %c0 = arith.constant 0 : index
    %c0_0 = arith.constant 0 : index
    %0 = vector.load %arg1[%c0, %c0_0] : memref<8x1024xf32, #tpu.memory_space<vmem>>, vector<8x1024xf32>
    %1 = arith.truncf %0 : vector<8x1024xf32> to vector<8x1024xbf16>
    %c0_1 = arith.constant 0 : index
    %c0_2 = arith.constant 0 : index
    %2 = vector.load %arg3[%c0_1, %c0_2] : memref<1024x128xbf16, #tpu.memory_space<vmem>>, vector<1024x128xbf16>
    %cst = arith.constant dense<0.000000e+00> : vector<8x128xf32>
    %3 = tpu.matmul %1, %2, %cst {dimension_numbers = #tpu.dot_dimension_numbers<[1], [0], [0], [1], [0, 0, 1, 1], [], []>} : vector<8x1024xbf16>, vector<1024x128xbf16>, vector<8x128xf32> -> vector<8x128xf32>
    %c0_3 = arith.constant 0 : index
    %c0_4 = arith.constant 0 : index
    %4 = vector.load %arg2[%c0_3, %c0_4] : memref<8x1xi32, #tpu.memory_space<vmem>>, vector<8x1xi32>
    %c0_5 = arith.constant 0 : index
    %c0_6 = arith.constant 0 : index
    %5 = vector.load %arg4[%c0_5, %c0_6] : memref<4x128xf32, #tpu.memory_space<vmem>>, vector<4x128xf32>
    %c0_i32 = arith.constant 0 : i32
    %6 = vector.broadcast %c0_i32 : i32 to vector<8x1xi32>
    %7 = arith.cmpi eq, %4, %6 : vector<8x1xi32>
    %8 = arith.extui %7 : vector<8x1xi1> to vector<8x1xi32>
    %9 = arith.sitofp %8 : vector<8x1xi32> to vector<8x1xf32>
    %10 = vector.extract_strided_slice %5 {offsets = [0, 0], sizes = [1, 128], strides = [1, 1]} : vector<4x128xf32> to vector<1x128xf32>
    %11 = vector.shape_cast %10 : vector<1x128xf32> to vector<128xf32>
    %12 = vector.shape_cast %11 : vector<128xf32> to vector<1x128xf32>
    %13 = vector.broadcast %9 : vector<8x1xf32> to vector<8x128xf32>
    %14 = vector.broadcast %12 : vector<1x128xf32> to vector<8x128xf32>
    %15 = arith.mulf %13, %14 : vector<8x128xf32>
    %16 = arith.addf %3, %15 : vector<8x128xf32>
    %c1_i32 = arith.constant 1 : i32
    %17 = vector.broadcast %c1_i32 : i32 to vector<8x1xi32>
    %18 = arith.cmpi eq, %4, %17 : vector<8x1xi32>
    %19 = arith.extui %18 : vector<8x1xi1> to vector<8x1xi32>
    %20 = arith.sitofp %19 : vector<8x1xi32> to vector<8x1xf32>
    %21 = vector.extract_strided_slice %5 {offsets = [1, 0], sizes = [1, 128], strides = [1, 1]} : vector<4x128xf32> to vector<1x128xf32>
    %22 = vector.shape_cast %21 : vector<1x128xf32> to vector<128xf32>
    %23 = vector.shape_cast %22 : vector<128xf32> to vector<1x128xf32>
    %24 = vector.broadcast %20 : vector<8x1xf32> to vector<8x128xf32>
    %25 = vector.broadcast %23 : vector<1x128xf32> to vector<8x128xf32>
    %26 = arith.mulf %24, %25 : vector<8x128xf32>
    %27 = arith.addf %16, %26 : vector<8x128xf32>
    %c2_i32 = arith.constant 2 : i32
    %28 = vector.broadcast %c2_i32 : i32 to vector<8x1xi32>
    %29 = arith.cmpi eq, %4, %28 : vector<8x1xi32>
    %30 = arith.extui %29 : vector<8x1xi1> to vector<8x1xi32>
    %31 = arith.sitofp %30 : vector<8x1xi32> to vector<8x1xf32>
    %32 = vector.extract_strided_slice %5 {offsets = [2, 0], sizes = [1, 128], strides = [1, 1]} : vector<4x128xf32> to vector<1x128xf32>
    %33 = vector.shape_cast %32 : vector<1x128xf32> to vector<128xf32>
    %34 = vector.shape_cast %33 : vector<128xf32> to vector<1x128xf32>
    %35 = vector.broadcast %31 : vector<8x1xf32> to vector<8x128xf32>
    %36 = vector.broadcast %34 : vector<1x128xf32> to vector<8x128xf32>
    %37 = arith.mulf %35, %36 : vector<8x128xf32>
    %38 = arith.addf %27, %37 : vector<8x128xf32>
    %c3_i32 = arith.constant 3 : i32
    %39 = vector.broadcast %c3_i32 : i32 to vector<8x1xi32>
    %40 = arith.cmpi eq, %4, %39 : vector<8x1xi32>
    %41 = arith.extui %40 : vector<8x1xi1> to vector<8x1xi32>
    %42 = arith.sitofp %41 : vector<8x1xi32> to vector<8x1xf32>
    %43 = vector.extract_strided_slice %5 {offsets = [3, 0], sizes = [1, 128], strides = [1, 1]} : vector<4x128xf32> to vector<1x128xf32>
    %44 = vector.shape_cast %43 : vector<1x128xf32> to vector<128xf32>
    %45 = vector.shape_cast %44 : vector<128xf32> to vector<1x128xf32>
    %46 = vector.broadcast %42 : vector<8x1xf32> to vector<8x128xf32>
    %47 = vector.broadcast %45 : vector<1x128xf32> to vector<8x128xf32>
    %48 = arith.mulf %46, %47 : vector<8x128xf32>
    %49 = arith.addf %38, %48 : vector<8x128xf32>
    %c0_7 = arith.constant 0 : index
    %c0_8 = arith.constant 0 : index
    %50 = vector.load %arg5[%c0_7, %c0_8] : memref<1x128xf32, #tpu.memory_space<vmem>>, vector<1x128xf32>
    %51 = vector.broadcast %50 : vector<1x128xf32> to vector<8x128xf32>
    %52 = arith.addf %49, %51 : vector<8x128xf32>
    %cst_9 = arith.constant 0.000000e+00 : f32
    %53 = vector.broadcast %cst_9 : f32 to vector<8x128xf32>
    %54 = arith.maximumf %52, %53 : vector<8x128xf32>
    %55 = arith.truncf %54 : vector<8x128xf32> to vector<8x128xbf16>
    %c0_10 = arith.constant 0 : index
    %c0_11 = arith.constant 0 : index
    %56 = vector.load %arg6[%c0_10, %c0_11] : memref<128x128xbf16, #tpu.memory_space<vmem>>, vector<128x128xbf16>
    %cst_12 = arith.constant dense<0.000000e+00> : vector<8x128xf32>
    %57 = tpu.matmul %55, %56, %cst_12 {dimension_numbers = #tpu.dot_dimension_numbers<[1], [0], [0], [1], [0, 0, 1, 1], [], []>} : vector<8x128xbf16>, vector<128x128xbf16>, vector<8x128xf32> -> vector<8x128xf32>
    %c0_13 = arith.constant 0 : index
    %c0_14 = arith.constant 0 : index
    %58 = vector.load %arg7[%c0_13, %c0_14] : memref<1x128xf32, #tpu.memory_space<vmem>>, vector<1x128xf32>
    %59 = vector.broadcast %58 : vector<1x128xf32> to vector<8x128xf32>
    %60 = arith.addf %57, %59 : vector<8x128xf32>
    %c0_15 = arith.constant 0 : index
    %c0_16 = arith.constant 0 : index
    %61 = vector.load %arg8[%c0_15, %c0_16] : memref<8x128xf32, #tpu.memory_space<vmem>>, vector<8x128xf32>
    tpu.vector_store %arg8[%c0_15, %c0_16], %60 {strides = array<i32>} : memref<8x128xf32, #tpu.memory_space<vmem>>, vector<8x128xf32>,
    return
  }
  func.func @transform_0(%arg0: i32) -> (i32, i32) {
    %c0_i32 = arith.constant 0 : i32
    %c0_i32_0 = arith.constant 0 : i32
    return %arg0, %c0_i32 : i32, i32
  }
  func.func @transform_1(%arg0: i32) -> (i32, i32) {
    %c0_i32 = arith.constant 0 : i32
    %c0_i32_0 = arith.constant 0 : i32
    return %arg0, %c0_i32 : i32, i32
  }
  func.func @transform_2(%arg0: i32) -> (i32, i32) {
    %c0_i32 = arith.constant 0 : i32
    %c0_i32_0 = arith.constant 0 : i32
    %c0_i32_1 = arith.constant 0 : i32
    return %c0_i32, %c0_i32_0 : i32, i32
  }
  func.func @transform_3(%arg0: i32) -> (i32, i32) {
    %c0_i32 = arith.constant 0 : i32
    %c0_i32_0 = arith.constant 0 : i32
    %c0_i32_1 = arith.constant 0 : i32
    return %c0_i32, %c0_i32_0 : i32, i32
  }
  func.func @transform_4(%arg0: i32) -> (i32, i32) {
    %c0_i32 = arith.constant 0 : i32
    %c0_i32_0 = arith.constant 0 : i32
    %c0_i32_1 = arith.constant 0 : i32
    return %c0_i32, %c0_i32_0 : i32, i32
  }
  func.func @transform_5(%arg0: i32) -> (i32, i32) {
    %c0_i32 = arith.constant 0 : i32
    %c0_i32_0 = arith.constant 0 : i32
    %c0_i32_1 = arith.constant 0 : i32
    return %c0_i32, %c0_i32_0 : i32, i32
  }
  func.func @transform_6(%arg0: i32) -> (i32, i32) {
    %c0_i32 = arith.constant 0 : i32
    %c0_i32_0 = arith.constant 0 : i32
    %c0_i32_1 = arith.constant 0 : i32
    return %c0_i32, %c0_i32_0 : i32, i32
  }
  func.func @transform_7(%arg0: i32) -> (i32, i32) {
    %c0_i32 = arith.constant 0 : i32
    %c0_i32_0 = arith.constant 0 : i32
    return %arg0, %c0_i32 : i32, i32
  }
}

</mosaic_0001>

<llo_original>
// kernel: agent_simple_forward.1
$region0: #{agent_simple_forward.1}
  #allocation0 [shape = 'u32[]', space=smem, size = 0x4, offset = 0x4, fixed_abs, tag = 'smem constant byte address 0x4 - core index']
  #allocation1 [shape = 'u32[144,128]{1,0:T(1,128)}', space=vmem, size = 0x12000, scoped, tag = 'internal scratch']
  %s0 = inlined_call_operand.vmem [shape: f32[2,1024], index: 0, kind: input, shape index: {}]
  %s1 = inlined_call_operand.vmem [shape: s32[2,1], index: 1, kind: input, shape index: {}]
  %s2 = inlined_call_operand.hbm [shape: bf16[1024,128], index: 2, kind: input, shape index: {}]
  %s3 = inlined_call_operand.vmem [shape: f32[4,128], index: 3, kind: input, shape index: {}]
  %s4 = inlined_call_operand.vmem [shape: f32[1,128], index: 4, kind: input, shape index: {}]
  %s5 = inlined_call_operand.vmem [shape: bf16[128,128], index: 5, kind: input, shape index: {}]
  %s6 = inlined_call_operand.vmem [shape: f32[1,128], index: 6, kind: input, shape index: {}]
  %s7 = inlined_call_operand.vmem [shape: f32[2,128], index: 7, kind: output, shape index: {}]
  %s8 = sld [smem:[#allocation0]]
  $region72: #{agent_simple_forward.1} parent=0
    _
  %s10 = ssub.s32 1, %s8
  %s11 = scalar_select 0, %s10, %s8
  $region1: #{agent_simple_forward.1} parent=0
    #allocation2 [shape = 'u8[262144]{0}', space=vmem, size = 0x40000, scoped, tag = 'input window, operand 2, single buffered']
    #allocation3 [shape = 's32[1]{0}', space=sflag, size = 0x4, scoped, tag = 'scoped memory for agent_simple_forward.1']
    #allocation4 [shape = 'u8[4096]{0}', space=vmem, size = 0x1000, scoped, tag = 'output window, operand 0, single buffered']
    %12 = vsyncpa [#allocation3], 0
    // Predicated region
    $region2: #{agent_simple_forward.1} parent=1 // pred_check
      _
    $region3: #{agent_simple_forward.1} parent=1 // pred_check_branch
      %14 = sbr.rel (0) target = $region5
    $region4: #{agent_simple_forward.1} parent=1 // pred_region
      _
    $region5: #{agent_simple_forward.1} parent=1 // pred_fallthru
      _
    // Predicated region
    $region6: #{agent_simple_forward.1} parent=1 // pred_check
      _
    $region7: #{agent_simple_forward.1} parent=1 // pred_check_branch
      %16 = sbr.rel (0) target = $region9
    $region8: #{agent_simple_forward.1} parent=1 // pred_region
      _
    $region9: #{agent_simple_forward.1} parent=1 // pred_fallthru
      _
    // Predicated region
    $region10: #{agent_simple_forward.1} parent=1 // pred_check
      _
    $region11: #{agent_simple_forward.1} parent=1 // pred_check_branch
      %18 = sbr.rel (0) target = $region13
    $region12: #{agent_simple_forward.1} parent=1 // pred_region
      %s20 = ssub.s32 8192, 8192
      %21 = vsyncadd [#allocation3], %s20
      %s22 = sshll.u32 [#allocation2], 4
      %s23 = int_to_ptr.vmem [resolvable:$true] %s22
      %28 = dma.hbm_to_vmem [thread:$0]  %s2, 8192, %s23, [#allocation3], 64, 64, 4
    $region13: #{agent_simple_forward.1} parent=1 // pred_fallthru
      _
    // Predicated region
    $region14: #{agent_simple_forward.1} parent=1 // pred_check
      _
    $region15: #{agent_simple_forward.1} parent=1 // pred_check_branch
      %30 = sbr.rel (0) target = $region17
    $region16: #{agent_simple_forward.1} parent=1 // pred_region
      _
    $region17: #{agent_simple_forward.1} parent=1 // pred_fallthru
      _
    // Predicated region
    $region18: #{agent_simple_forward.1} parent=1 // pred_check
      _
    $region19: #{agent_simple_forward.1} parent=1 // pred_check_branch
      %32 = sbr.rel (0) target = $region21
    $region20: #{agent_simple_forward.1} parent=1 // pred_region
      _
    $region21: #{agent_simple_forward.1} parent=1 // pred_fallthru
      _
    // Predicated region
    $region22: #{agent_simple_forward.1} parent=1 // pred_check
      _
    $region23: #{agent_simple_forward.1} parent=1 // pred_check_branch
      %34 = sbr.rel (0) target = $region25
    $region24: #{agent_simple_forward.1} parent=1 // pred_region
      _
    $region25: #{agent_simple_forward.1} parent=1 // pred_fallthru
      _
    // Predicated region
    $region26: #{agent_simple_forward.1} parent=1 // pred_check
      _
    $region27: #{agent_simple_forward.1} parent=1 // pred_check_branch
      %36 = sbr.rel (0) target = $region29
    $region28: #{agent_simple_forward.1} parent=1 // pred_region
      _
    $region29: #{agent_simple_forward.1} parent=1 // pred_fallthru
      _
    // Predicated region
    $region30: #{agent_simple_forward.1} parent=1 // pred_check
      _
    $region31: #{agent_simple_forward.1} parent=1 // pred_check_branch
      %38 = sbr.rel (0) target = $region33
    $region32: #{agent_simple_forward.1} parent=1 // pred_region
      %39 = dma.done [#allocation3], 8192
    $region33: #{agent_simple_forward.1} parent=1 // pred_fallthru
      _
    %v41 = vld [vmem:[%s0] sm:$0xff]
    %v42 = vld [vmem:[%s0 + $0x8] sm:$0xff]
    %v43 = vld [vmem:[%s0 + $0x10] sm:$0xff]
    %v44 = vld [vmem:[%s0 + $0x18] sm:$0xff]
    %v45 = vld [vmem:[%s0 + $0x20] sm:$0xff]
    %v46 = vld [vmem:[%s0 + $0x28] sm:$0xff]
    %v47 = vld [vmem:[%s0 + $0x30] sm:$0xff]
    %v48 = vld [vmem:[%s0 + $0x38] sm:$0xff]
    %v57 = vcombine.low %v41, %v43
    %v58 = vcombine.high %v41, %v43
    %v59 = vcombine.low %v45, %v47
    %v60 = vcombine.high %v45, %v47
    %v62 = vunpack.c.l.s4 1983009808
    %v63 = vunpack.c.0.s8 %v62
    %v64 = vlaneseq
    %v65 = vshrl.u32 %v64, 7
    %v66 = vsub.s32 %v63, %v65
    %v67 = vrot.slane %v57, %v66
    %v69 = vunpack.c.l.s4 1983009808
    %v70 = vunpack.c.0.s8 %v69
    %v71 = vlaneseq
    %v72 = vshrl.u32 %v71, 7
    %v73 = vsub.s32 %v70, %v72
    %v74 = vrot.slane %v58, %v73
    %v76 = vunpack.c.l.s4 1983009808
    %v77 = vunpack.c.0.s8 %v76
    %v78 = vlaneseq
    %v79 = vshrl.u32 %v78, 7
    %v80 = vsub.s32 %v77, %v79
    %v81 = vrot.slane %v59, %v80
    %v83 = vunpack.c.l.s4 1983009808
    %v84 = vunpack.c.0.s8 %v83
    %v85 = vlaneseq
    %v86 = vshrl.u32 %v85, 7
    %v87 = vsub.s32 %v84, %v86
    %v88 = vrot.slane %v60, %v87
    %v89 = vcombine.low %v67, %v81
    %v90 = vcombine.high %v67, %v81
    %v91 = vcombine.low %v74, %v88
    %v92 = vcombine.high %v74, %v88
    %v93 = vcombine.low %v42, %v44
    %v94 = vcombine.high %v42, %v44
    %v95 = vcombine.low %v46, %v48
    %v96 = vcombine.high %v46, %v48
    %v98 = vunpack.c.l.s4 1983009808
    %v99 = vunpack.c.0.s8 %v98
    %v100 = vlaneseq
    %v101 = vshrl.u32 %v100, 7
    %v102 = vsub.s32 %v99, %v101
    %v103 = vrot.slane %v93, %v102
    %v105 = vunpack.c.l.s4 1983009808
    %v106 = vunpack.c.0.s8 %v105
    %v107 = vlaneseq
    %v108 = vshrl.u32 %v107, 7
    %v109 = vsub.s32 %v106, %v108
    %v110 = vrot.slane %v94, %v109
    %v112 = vunpack.c.l.s4 1983009808
    %v113 = vunpack.c.0.s8 %v112
    %v114 = vlaneseq
    %v115 = vshrl.u32 %v114, 7
    %v116 = vsub.s32 %v113, %v115
    %v117 = vrot.slane %v95, %v116
    %v119 = vunpack.c.l.s4 1983009808
    %v120 = vunpack.c.0.s8 %v119
    %v121 = vlaneseq
    %v122 = vshrl.u32 %v121, 7
    %v123 = vsub.s32 %v120, %v122
    %v124 = vrot.slane %v96, %v123
    %v125 = vcombine.low %v103, %v117
    %v126 = vcombine.high %v103, %v117
    %v127 = vcombine.low %v110, %v124
    %v128 = vcombine.high %v110, %v124
    %v137 = vpack.c.bf16 %v89, %v89
    %v138 = vpack.c.bf16 %v90, %v90
    %v139 = vpack.c.bf16 %v91, %v91
    %v140 = vpack.c.bf16 %v92, %v92
    %v141 = vpack.c.bf16 %v125, %v125
    %v142 = vpack.c.bf16 %v126, %v126
    %v143 = vpack.c.bf16 %v127, %v127
    %v144 = vpack.c.bf16 %v128, %v128
    %v145 = vld [vmem:[#allocation2] sm:$0xf]
    %v146 = vld [vmem:[#allocation2 + $0x4] sm:$0xf]
    %v147 = vld [vmem:[#allocation2 + $0x8] sm:$0xf]
    %v148 = vld [vmem:[#allocation2 + $0xc] sm:$0xf]
    %v149 = vld [vmem:[#allocation2 + $0x10] sm:$0xf]
    %v150 = vld [vmem:[#allocation2 + $0x14] sm:$0xf]
    %v151 = vld [vmem:[#allocation2 + $0x18] sm:$0xf]
    %v152 = vld [vmem:[#allocation2 + $0x1c] sm:$0xf]
    %v153 = vld [vmem:[#allocation2 + $0x20] sm:$0xf]
    %v154 = vld [vmem:[#allocation2 + $0x24] sm:$0xf]
    %v155 = vld [vmem:[#allocation2 + $0x28] sm:$0xf]
    %v156 = vld [vmem:[#allocation2 + $0x2c] sm:$0xf]
    %v157 = vld [vmem:[#allocation2 + $0x30] sm:$0xf]
    %v158 = vld [vmem:[#allocation2 + $0x34] sm:$0xf]
    %v159 = vld [vmem:[#allocation2 + $0x38] sm:$0xf]
    %v160 = vld [vmem:[#allocation2 + $0x3c] sm:$0xf]
    %v161 = vld [vmem:[#allocation2 + $0x40] sm:$0xf]
    %v162 = vld [vmem:[#allocation2 + $0x44] sm:$0xf]
    %v163 = vld [vmem:[#allocation2 + $0x48] sm:$0xf]
    %v164 = vld [vmem:[#allocation2 + $0x4c] sm:$0xf]
    %v165 = vld [vmem:[#allocation2 + $0x50] sm:$0xf]
    %v166 = vld [vmem:[#allocation2 + $0x54] sm:$0xf]
    %v167 = vld [vmem:[#allocation2 + $0x58] sm:$0xf]
    %v168 = vld [vmem:[#allocation2 + $0x5c] sm:$0xf]
    %v169 = vld [vmem:[#allocation2 + $0x60] sm:$0xf]
    %v170 = vld [vmem:[#allocation2 + $0x64] sm:$0xf]
    %v171 = vld [vmem:[#allocation2 + $0x68] sm:$0xf]
    %v172 = vld [vmem:[#allocation2 + $0x6c] sm:$0xf]
    %v173 = vld [vmem:[#allocation2 + $0x70] sm:$0xf]
    %v174 = vld [vmem:[#allocation2 + $0x74] sm:$0xf]
    %v175 = vld [vmem:[#allocation2 + $0x78] sm:$0xf]
    %v176 = vld [vmem:[#allocation2 + $0x7c] sm:$0xf]
    %v177 = vld [vmem:[#allocation2 + $0x80] sm:$0xf]
    %v178 = vld [vmem:[#allocation2 + $0x84] sm:$0xf]
    %v179 = vld [vmem:[#allocation2 + $0x88] sm:$0xf]
    %v180 = vld [vmem:[#allocation2 + $0x8c] sm:$0xf]
    %v181 = vld [vmem:[#allocation2 + $0x90] sm:$0xf]
    %v182 = vld [vmem:[#allocation2 + $0x94] sm:$0xf]
    %v183 = vld [vmem:[#allocation2 + $0x98] sm:$0xf]
    %v184 = vld [vmem:[#allocation2 + $0x9c] sm:$0xf]
    %v185 = vld [vmem:[#allocation2 + $0xa0] sm:$0xf]
    %v186 = vld [vmem:[#allocation2 + $0xa4] sm:$0xf]
    %v187 = vld [vmem:[#allocation2 + $0xa8] sm:$0xf]
    %v188 = vld [vmem:[#allocation2 + $0xac] sm:$0xf]
    %v189 = vld [vmem:[#allocation2 + $0xb0] sm:$0xf]
    %v190 = vld [vmem:[#allocation2 + $0xb4] sm:$0xf]
    %v191 = vld [vmem:[#allocation2 + $0xb8] sm:$0xf]
    %v192 = vld [vmem:[#allocation2 + $0xbc] sm:$0xf]
    %v193 = vld [vmem:[#allocation2 + $0xc0] sm:$0xf]
    %v194 = vld [vmem:[#allocation2 + $0xc4] sm:$0xf]
    %v195 = vld [vmem:[#allocation2 + $0xc8] sm:$0xf]
    %v196 = vld [vmem:[#allocation2 + $0xcc] sm:$0xf]
    %v197 = vld [vmem:[#allocation2 + $0xd0] sm:$0xf]
    %v198 = vld [vmem:[#allocation2 + $0xd4] sm:$0xf]
    %v199 = vld [vmem:[#allocation2 + $0xd8] sm:$0xf]
    %v200 = vld [vmem:[#allocation2 + $0xdc] sm:$0xf]
    %v201 = vld [vmem:[#allocation2 + $0xe0] sm:$0xf]
    %v202 = vld [vmem:[#allocation2 + $0xe4] sm:$0xf]
    %v203 = vld [vmem:[#allocation2 + $0xe8] sm:$0xf]
    %v204 = vld [vmem:[#allocation2 + $0xec] sm:$0xf]
    %v205 = vld [vmem:[#allocation2 + $0xf0] sm:$0xf]
    %v206 = vld [vmem:[#allocation2 + $0xf4] sm:$0xf]
    %v207 = vld [vmem:[#allocation2 + $0xf8] sm:$0xf]
    %v208 = vld [vmem:[#allocation2 + $0xfc] sm:$0xf]
    %v209 = vld [vmem:[#allocation2 + $0x100] sm:$0xf]
    %v210 = vld [vmem:[#allocation2 + $0x104] sm:$0xf]
    %v211 = vld [vmem:[#allocation2 + $0x108] sm:$0xf]
    %v212 = vld [vmem:[#allocation2 + $0x10c] sm:$0xf]
    %v213 = vld [vmem:[#allocation2 + $0x110] sm:$0xf]
    %v214 = vld [vmem:[#allocation2 + $0x114] sm:$0xf]
    %v215 = vld [vmem:[#allocation2 + $0x118] sm:$0xf]
    %v216 = vld [vmem:[#allocation2 + $0x11c] sm:$0xf]
    %v217 = vld [vmem:[#allocation2 + $0x120] sm:$0xf]
    %v218 = vld [vmem:[#allocation2 + $0x124] sm:$0xf]
    %v219 = vld [vmem:[#allocation2 + $0x128] sm:$0xf]
    %v220 = vld [vmem:[#allocation2 + $0x12c] sm:$0xf]
    %v221 = vld [vmem:[#allocation2 + $0x130] sm:$0xf]
    %v222 = vld [vmem:[#allocation2 + $0x134] sm:$0xf]
    %v223 = vld [vmem:[#allocation2 + $0x138] sm:$0xf]
    %v224 = vld [vmem:[#allocation2 + $0x13c] sm:$0xf]
    %v225 = vld [vmem:[#allocation2 + $0x140] sm:$0xf]
    %v226 = vld [vmem:[#allocation2 + $0x144] sm:$0xf]
    %v227 = vld [vmem:[#allocation2 + $0x148] sm:$0xf]
    %v228 = vld [vmem:[#allocation2 + $0x14c] sm:$0xf]
    %v229 = vld [vmem:[#allocation2 + $0x150] sm:$0xf]
    %v230 = vld [vmem:[#allocation2 + $0x154] sm:$0xf]
    %v231 = vld [vmem:[#allocation2 + $0x158] sm:$0xf]
    %v232 = vld [vmem:[#allocation2 + $0x15c] sm:$0xf]
    %v233 = vld [vmem:[#allocation2 + $0x160] sm:$0xf]
    %v234 = vld [vmem:[#allocation2 + $0x164] sm:$0xf]
    %v235 = vld [vmem:[#allocation2 + $0x168] sm:$0xf]
    %v236 = vld [vmem:[#allocation2 + $0x16c] sm:$0xf]
    %v237 = vld [vmem:[#allocation2 + $0x170] sm:$0xf]
    %v238 = vld [vmem:[#allocation2 + $0x174] sm:$0xf]
    %v239 = vld [vmem:[#allocation2 + $0x178] sm:$0xf]
    %v240 = vld [vmem:[#allocation2 + $0x17c] sm:$0xf]
    %v241 = vld [vmem:[#allocation2 + $0x180] sm:$0xf]
    %v242 = vld [vmem:[#allocation2 + $0x184] sm:$0xf]
    %v243 = vld [vmem:[#allocation2 + $0x188] sm:$0xf]
    %v244 = vld [vmem:[#allocation2 + $0x18c] sm:$0xf]
    %v245 = vld [vmem:[#allocation2 + $0x190] sm:$0xf]
    %v246 = vld [vmem:[#allocation2 + $0x194] sm:$0xf]
    %v247 = vld [vmem:[#allocation2 + $0x198] sm:$0xf]
    %v248 = vld [vmem:[#allocation2 + $0x19c] sm:$0xf]
    %v249 = vld [vmem:[#allocation2 + $0x1a0] sm:$0xf]
    %v250 = vld [vmem:[#allocation2 + $0x1a4] sm:$0xf]
    %v251 = vld [vmem:[#allocation2 + $0x1a8] sm:$0xf]
    %v252 = vld [vmem:[#allocation2 + $0x1ac] sm:$0xf]
    %v253 = vld [vmem:[#allocation2 + $0x1b0] sm:$0xf]
    %v254 = vld [vmem:[#allocation2 + $0x1b4] sm:$0xf]
    %v255 = vld [vmem:[#allocation2 + $0x1b8] sm:$0xf]
    %v256 = vld [vmem:[#allocation2 + $0x1bc] sm:$0xf]
    %v257 = vld [vmem:[#allocation2 + $0x1c0] sm:$0xf]
    %v258 = vld [vmem:[#allocation2 + $0x1c4] sm:$0xf]
    %v259 = vld [vmem:[#allocation2 + $0x1c8] sm:$0xf]
    %v260 = vld [vmem:[#allocation2 + $0x1cc] sm:$0xf]
    %v261 = vld [vmem:[#allocation2 + $0x1d0] sm:$0xf]
    %v262 = vld [vmem:[#allocation2 + $0x1d4] sm:$0xf]
    %v263 = vld [vmem:[#allocation2 + $0x1d8] sm:$0xf]
    %v264 = vld [vmem:[#allocation2 + $0x1dc] sm:$0xf]
    %v265 = vld [vmem:[#allocation2 + $0x1e0] sm:$0xf]
    %v266 = vld [vmem:[#allocation2 + $0x1e4] sm:$0xf]
    %v267 = vld [vmem:[#allocation2 + $0x1e8] sm:$0xf]
    %v268 = vld [vmem:[#allocation2 + $0x1ec] sm:$0xf]
    %v269 = vld [vmem:[#allocation2 + $0x1f0] sm:$0xf]
    %v270 = vld [vmem:[#allocation2 + $0x1f4] sm:$0xf]
    %v271 = vld [vmem:[#allocation2 + $0x1f8] sm:$0xf]
    %v272 = vld [vmem:[#allocation2 + $0x1fc] sm:$0xf]
    %v273 = vld [vmem:[%s1] sm:$0xff]
    %v274 = vld [vmem:[%s3] sm:$0xf]
    %vm275 = vcmp.eq.s32.totalorder %v273, 0
    %v276 = vsel %vm275, 1, 0
    %v277 = vcvt.s32.f32 %v276
    %279 = vset.pattern.permute.xlu0 0
    %280 = vperm.xlu0 %279, %v277
    %v281 = vpop.permute.xlu0 %280
    %v283 = vlaneseq
    %v284 = vshrl.u32 %v283, 7
    %v285 = vsub.s32 0, %v284
    %v286 = vrot.slane %v274, %v285
    %v287 = vmul.f32 %v281, %v286
    %v416 = vunpack.c.l.b16 %v145
    %v417 = vunpack.c.l.b16 %v146
    %v418 = vunpack.c.l.b16 %v147
    %v419 = vunpack.c.l.b16 %v148
    %v420 = vunpack.c.l.b16 %v149
    %v421 = vunpack.c.l.b16 %v150
    %v422 = vunpack.c.l.b16 %v151
    %v423 = vunpack.c.l.b16 %v152
    %v424 = vunpack.c.l.b16 %v153
    %v425 = vunpack.c.l.b16 %v154
    %v426 = vunpack.c.l.b16 %v155
    %v427 = vunpack.c.l.b16 %v156
    %v428 = vunpack.c.l.b16 %v157
    %v429 = vunpack.c.l.b16 %v158
    %v430 = vunpack.c.l.b16 %v159
    %v431 = vunpack.c.l.b16 %v160
    %v432 = vunpack.c.l.b16 %v161
    %v433 = vunpack.c.l.b16 %v162
    %v434 = vunpack.c.l.b16 %v163
    %v435 = vunpack.c.l.b16 %v164
    %v436 = vunpack.c.l.b16 %v165
    %v437 = vunpack.c.l.b16 %v166
    %v438 = vunpack.c.l.b16 %v167
    %v439 = vunpack.c.l.b16 %v168
    %v440 = vunpack.c.l.b16 %v169
    %v441 = vunpack.c.l.b16 %v170
    %v442 = vunpack.c.l.b16 %v171
    %v443 = vunpack.c.l.b16 %v172
    %v444 = vunpack.c.l.b16 %v173
    %v445 = vunpack.c.l.b16 %v174
    %v446 = vunpack.c.l.b16 %v175
    %v447 = vunpack.c.l.b16 %v176
    %v448 = vunpack.c.l.b16 %v177
    %v449 = vunpack.c.l.b16 %v178
    %v450 = vunpack.c.l.b16 %v179
    %v451 = vunpack.c.l.b16 %v180
    %v452 = vunpack.c.l.b16 %v181
    %v453 = vunpack.c.l.b16 %v182
    %v454 = vunpack.c.l.b16 %v183
    %v455 = vunpack.c.l.b16 %v184
    %v456 = vunpack.c.l.b16 %v185
    %v457 = vunpack.c.l.b16 %v186
    %v458 = vunpack.c.l.b16 %v187
    %v459 = vunpack.c.l.b16 %v188
    %v460 = vunpack.c.l.b16 %v189
    %v461 = vunpack.c.l.b16 %v190
    %v462 = vunpack.c.l.b16 %v191
    %v463 = vunpack.c.l.b16 %v192
    %v464 = vunpack.c.l.b16 %v193
    %v465 = vunpack.c.l.b16 %v194
    %v466 = vunpack.c.l.b16 %v195
    %v467 = vunpack.c.l.b16 %v196
    %v468 = vunpack.c.l.b16 %v197
    %v469 = vunpack.c.l.b16 %v198
    %v470 = vunpack.c.l.b16 %v199
    %v471 = vunpack.c.l.b16 %v200
    %v472 = vunpack.c.l.b16 %v201
    %v473 = vunpack.c.l.b16 %v202
    %v474 = vunpack.c.l.b16 %v203
    %v475 = vunpack.c.l.b16 %v204
    %v476 = vunpack.c.l.b16 %v205
    %v477 = vunpack.c.l.b16 %v206
    %v478 = vunpack.c.l.b16 %v207
    %v479 = vunpack.c.l.b16 %v208
    %v480 = vunpack.c.l.b16 %v209
    %v481 = vunpack.c.l.b16 %v210
    %v482 = vunpack.c.l.b16 %v211
    %v483 = vunpack.c.l.b16 %v212
    %v484 = vunpack.c.l.b16 %v213
    %v485 = vunpack.c.l.b16 %v214
    %v486 = vunpack.c.l.b16 %v215
    %v487 = vunpack.c.l.b16 %v216
    %v488 = vunpack.c.l.b16 %v217
    %v489 = vunpack.c.l.b16 %v218
    %v490 = vunpack.c.l.b16 %v219
    %v491 = vunpack.c.l.b16 %v220
    %v492 = vunpack.c.l.b16 %v221
    %v493 = vunpack.c.l.b16 %v222
    %v494 = vunpack.c.l.b16 %v223
    %v495 = vunpack.c.l.b16 %v224
    %v496 = vunpack.c.l.b16 %v225
    %v497 = vunpack.c.l.b16 %v226
    %v498 = vunpack.c.l.b16 %v227
    %v499 = vunpack.c.l.b16 %v228
    %v500 = vunpack.c.l.b16 %v229
    %v501 = vunpack.c.l.b16 %v230
    %v502 = vunpack.c.l.b16 %v231
    %v503 = vunpack.c.l.b16 %v232
    %v504 = vunpack.c.l.b16 %v233
    %v505 = vunpack.c.l.b16 %v234
    %v506 = vunpack.c.l.b16 %v235
    %v507 = vunpack.c.l.b16 %v236
    %v508 = vunpack.c.l.b16 %v237
    %v509 = vunpack.c.l.b16 %v238
    %v510 = vunpack.c.l.b16 %v239
    %v511 = vunpack.c.l.b16 %v240
    %v512 = vunpack.c.l.b16 %v241
    %v513 = vunpack.c.l.b16 %v242
    %v514 = vunpack.c.l.b16 %v243
    %v515 = vunpack.c.l.b16 %v244
    %v516 = vunpack.c.l.b16 %v245
    %v517 = vunpack.c.l.b16 %v246
    %v518 = vunpack.c.l.b16 %v247
    %v519 = vunpack.c.l.b16 %v248
    %v520 = vunpack.c.l.b16 %v249
    %v521 = vunpack.c.l.b16 %v250
    %v522 = vunpack.c.l.b16 %v251
    %v523 = vunpack.c.l.b16 %v252
    %v524 = vunpack.c.l.b16 %v253
    %v525 = vunpack.c.l.b16 %v254
    %v526 = vunpack.c.l.b16 %v255
    %v527 = vunpack.c.l.b16 %v256
    %v528 = vunpack.c.l.b16 %v257
    %v529 = vunpack.c.l.b16 %v258
    %v530 = vunpack.c.l.b16 %v259
    %v531 = vunpack.c.l.b16 %v260
    %v532 = vunpack.c.l.b16 %v261
    %v533 = vunpack.c.l.b16 %v262
    %v534 = vunpack.c.l.b16 %v263
    %v535 = vunpack.c.l.b16 %v264
    %v536 = vunpack.c.l.b16 %v265
    %v537 = vunpack.c.l.b16 %v266
    %v538 = vunpack.c.l.b16 %v267
    %v539 = vunpack.c.l.b16 %v268
    %v540 = vunpack.c.l.b16 %v269
    %v541 = vunpack.c.l.b16 %v270
    %v542 = vunpack.c.l.b16 %v271
    %v543 = vunpack.c.l.b16 %v272
    %v544 = vpack.c.b16 %v417, %v416
    %v545 = vpack.c.b16 %v419, %v418
    %v546 = vpack.c.b16 %v421, %v420
    %v547 = vpack.c.b16 %v423, %v422
    %v548 = vpack.c.b16 %v425, %v424
    %v549 = vpack.c.b16 %v427, %v426
    %v550 = vpack.c.b16 %v429, %v428
    %v551 = vpack.c.b16 %v431, %v430
    %v552 = vpack.c.b16 %v433, %v432
    %v553 = vpack.c.b16 %v435, %v434
    %v554 = vpack.c.b16 %v437, %v436
    %v555 = vpack.c.b16 %v439, %v438
    %v556 = vpack.c.b16 %v441, %v440
    %v557 = vpack.c.b16 %v443, %v442
    %v558 = vpack.c.b16 %v445, %v444
    %v559 = vpack.c.b16 %v447, %v446
    %v560 = vpack.c.b16 %v449, %v448
    %v561 = vpack.c.b16 %v451, %v450
    %v562 = vpack.c.b16 %v453, %v452
    %v563 = vpack.c.b16 %v455, %v454
    %v564 = vpack.c.b16 %v457, %v456
    %v565 = vpack.c.b16 %v459, %v458
    %v566 = vpack.c.b16 %v461, %v460
    %v567 = vpack.c.b16 %v463, %v462
    %v568 = vpack.c.b16 %v465, %v464
    %v569 = vpack.c.b16 %v467, %v466
    %v570 = vpack.c.b16 %v469, %v468
    %v571 = vpack.c.b16 %v471, %v470
    %v572 = vpack.c.b16 %v473, %v472
    %v573 = vpack.c.b16 %v475, %v474
    %v574 = vpack.c.b16 %v477, %v476
    %v575 = vpack.c.b16 %v479, %v478
    %v576 = vpack.c.b16 %v481, %v480
    %v577 = vpack.c.b16 %v483, %v482
    %v578 = vpack.c.b16 %v485, %v484
    %v579 = vpack.c.b16 %v487, %v486
    %v580 = vpack.c.b16 %v489, %v488
    %v581 = vpack.c.b16 %v491, %v490
    %v582 = vpack.c.b16 %v493, %v492
    %v583 = vpack.c.b16 %v495, %v494
    %v584 = vpack.c.b16 %v497, %v496
    %v585 = vpack.c.b16 %v499, %v498
    %v586 = vpack.c.b16 %v501, %v500
    %v587 = vpack.c.b16 %v503, %v502
    %v588 = vpack.c.b16 %v505, %v504
    %v589 = vpack.c.b16 %v507, %v506
    %v590 = vpack.c.b16 %v509, %v508
    %v591 = vpack.c.b16 %v511, %v510
    %v592 = vpack.c.b16 %v513, %v512
    %v593 = vpack.c.b16 %v515, %v514
    %v594 = vpack.c.b16 %v517, %v516
    %v595 = vpack.c.b16 %v519, %v518
    %v596 = vpack.c.b16 %v521, %v520
    %v597 = vpack.c.b16 %v523, %v522
    %v598 = vpack.c.b16 %v525, %v524
    %v599 = vpack.c.b16 %v527, %v526
    %v600 = vpack.c.b16 %v529, %v528
    %v601 = vpack.c.b16 %v531, %v530
    %v602 = vpack.c.b16 %v533, %v532
    %v603 = vpack.c.b16 %v535, %v534
    %v604 = vpack.c.b16 %v537, %v536
    %v605 = vpack.c.b16 %v539, %v538
    %v606 = vpack.c.b16 %v541, %v540
    %v607 = vpack.c.b16 %v543, %v542
    %672 = vmatprep.subr.bf16.mxu0 0
    %673 = vmatpush1.bf16.msra.mxu0 %v551
    %674 = vmatprep.subr.bf16.mxu0 0
    %675 = vmatpush1.bf16.msra.mxu0 %v550
    %676 = vmatprep.subr.bf16.mxu0 0
    %677 = vmatpush1.bf16.msra.mxu0 %v549
    %678 = vmatprep.subr.bf16.mxu0 0
    %679 = vmatpush1.bf16.msra.mxu0 %v548
    %680 = vmatprep.subr.bf16.mxu0 0
    %681 = vmatpush1.bf16.msra.mxu0 %v547
    %682 = vmatprep.subr.bf16.mxu0 0
    %683 = vmatpush1.bf16.msra.mxu0 %v546
    %684 = vmatprep.subr.bf16.mxu0 0
    %685 = vmatpush1.bf16.msra.mxu0 %v545
    %686 = vmatprep.subr.bf16.mxu0 0
    %687 = vmatpush1.bf16.msra.mxu0 %v544
    %688 = vmatprep.subr.bf16.mxu0 0
    %689 = vmatpush2.bf16.msra.mxu0 %v559
    %690 = vmatprep.subr.bf16.mxu0 0
    %691 = vmatpush2.bf16.msra.mxu0 %v558
    %692 = vmatprep.subr.bf16.mxu0 0
    %693 = vmatpush2.bf16.msra.mxu0 %v557
    %694 = vmatprep.subr.bf16.mxu0 0
    %695 = vmatpush2.bf16.msra.mxu0 %v556
    %696 = vmatprep.subr.bf16.mxu0 0
    %697 = vmatpush2.bf16.msra.mxu0 %v555
    %698 = vmatprep.subr.bf16.mxu0 0
    %699 = vmatpush2.bf16.msra.mxu0 %v554
    %700 = vmatprep.subr.bf16.mxu0 0
    %701 = vmatpush2.bf16.msra.mxu0 %v553
    %702 = vmatprep.subr.bf16.mxu0 0
    %703 = vmatpush2.bf16.msra.mxu0 %v552
    %704 = vmatprep.mubr.bf16.mxu0 %v138
    %705 = vmatmul.mubr.bf16.gmra.mxu0 %v137
    %v706 = vpop.f32.mrf.mxu0
    %v707 = vadd.f32 %v287, %v706
    %v708 = vpop.f32.mrf.mxu0
    %v709 = vpop.f32.mrf.mxu0
    %v710 = vpop.f32.mrf.mxu0
    %711 = vdwg.mxu0
    %712 = vmatprep.subr.bf16.mxu0 0
    %713 = vmatpush1.bf16.msra.mxu0 %v567
    %714 = vmatprep.subr.bf16.mxu0 0
    %715 = vmatpush1.bf16.msra.mxu0 %v566
    %716 = vmatprep.subr.bf16.mxu0 0
    %717 = vmatpush1.bf16.msra.mxu0 %v565
    %718 = vmatprep.subr.bf16.mxu0 0
    %719 = vmatpush1.bf16.msra.mxu0 %v564
    %720 = vmatprep.subr.bf16.mxu0 0
    %721 = vmatpush1.bf16.msra.mxu0 %v563
    %722 = vmatprep.subr.bf16.mxu0 0
    %723 = vmatpush1.bf16.msra.mxu0 %v562
    %724 = vmatprep.subr.bf16.mxu0 0
    %725 = vmatpush1.bf16.msra.mxu0 %v561
    %726 = vmatprep.subr.bf16.mxu0 0
    %727 = vmatpush1.bf16.msra.mxu0 %v560
    %728 = vmatprep.subr.bf16.mxu0 0
    %729 = vmatpush2.bf16.msra.mxu0 %v575
    %730 = vmatprep.subr.bf16.mxu0 0
    %731 = vmatpush2.bf16.msra.mxu0 %v574
    %732 = vmatprep.subr.bf16.mxu0 0
    %733 = vmatpush2.bf16.msra.mxu0 %v573
    %734 = vmatprep.subr.bf16.mxu0 0
    %735 = vmatpush2.bf16.msra.mxu0 %v572
    %736 = vmatprep.subr.bf16.mxu0 0
    %737 = vmatpush2.bf16.msra.mxu0 %v571
    %738 = vmatprep.subr.bf16.mxu0 0
    %739 = vmatpush2.bf16.msra.mxu0 %v570
    %740 = vmatprep.subr.bf16.mxu0 0
    %741 = vmatpush2.bf16.msra.mxu0 %v569
    %742 = vmatprep.subr.bf16.mxu0 0
    %743 = vmatpush2.bf16.msra.mxu0 %v568
    %744 = vmatprep.mubr.bf16.mxu0 %v140
    %745 = vmatmul.mubr.bf16.gmra.mxu0 %v139
    %v746 = vpop.f32.mrf.mxu0
    %v747 = vadd.f32 %v707, %v746
    %v748 = vpop.f32.mrf.mxu0
    %v749 = vpop.f32.mrf.mxu0
    %v750 = vpop.f32.mrf.mxu0
    %751 = vdwg.mxu0
    %752 = vmatprep.subr.bf16.mxu0 0
    %753 = vmatpush1.bf16.msra.mxu0 %v583
    %754 = vmatprep.subr.bf16.mxu0 0
    %755 = vmatpush1.bf16.msra.mxu0 %v582
    %756 = vmatprep.subr.bf16.mxu0 0
    %757 = vmatpush1.bf16.msra.mxu0 %v581
    %758 = vmatprep.subr.bf16.mxu0 0
    %759 = vmatpush1.bf16.msra.mxu0 %v580
    %760 = vmatprep.subr.bf16.mxu0 0
    %761 = vmatpush1.bf16.msra.mxu0 %v579
    %762 = vmatprep.subr.bf16.mxu0 0
    %763 = vmatpush1.bf16.msra.mxu0 %v578
    %764 = vmatprep.subr.bf16.mxu0 0
    %765 = vmatpush1.bf16.msra.mxu0 %v577
    %766 = vmatprep.subr.bf16.mxu0 0
    %767 = vmatpush1.bf16.msra.mxu0 %v576
    %768 = vmatprep.subr.bf16.mxu0 0
    %769 = vmatpush2.bf16.msra.mxu0 %v591
    %770 = vmatprep.subr.bf16.mxu0 0
    %771 = vmatpush2.bf16.msra.mxu0 %v590
    %772 = vmatprep.subr.bf16.mxu0 0
    %773 = vmatpush2.bf16.msra.mxu0 %v589
    %774 = vmatprep.subr.bf16.mxu0 0
    %775 = vmatpush2.bf16.msra.mxu0 %v588
    %776 = vmatprep.subr.bf16.mxu0 0
    %777 = vmatpush2.bf16.msra.mxu0 %v587
    %778 = vmatprep.subr.bf16.mxu0 0
    %779 = vmatpush2.bf16.msra.mxu0 %v586
    %780 = vmatprep.subr.bf16.mxu0 0
    %781 = vmatpush2.bf16.msra.mxu0 %v585
    %782 = vmatprep.subr.bf16.mxu0 0
    %783 = vmatpush2.bf16.msra.mxu0 %v584
    %784 = vmatprep.mubr.bf16.mxu0 %v142
    %785 = vmatmul.mubr.bf16.gmra.mxu0 %v141
    %v786 = vpop.f32.mrf.mxu0
    %v787 = vadd.f32 %v747, %v786
    %v788 = vpop.f32.mrf.mxu0
    %v789 = vpop.f32.mrf.mxu0
    %v790 = vpop.f32.mrf.mxu0
    %791 = vdwg.mxu0
    %792 = vmatprep.subr.bf16.mxu0 0
    %793 = vmatpush1.bf16.msra.mxu0 %v599
    %794 = vmatprep.subr.bf16.mxu0 0
    %795 = vmatpush1.bf16.msra.mxu0 %v598
    %796 = vmatprep.subr.bf16.mxu0 0
    %797 = vmatpush1.bf16.msra.mxu0 %v597
    %798 = vmatprep.subr.bf16.mxu0 0
    %799 = vmatpush1.bf16.msra.mxu0 %v596
    %800 = vmatprep.subr.bf16.mxu0 0
    %801 = vmatpush1.bf16.msra.mxu0 %v595
    %802 = vmatprep.subr.bf16.mxu0 0
    %803 = vmatpush1.bf16.msra.mxu0 %v594
    %804 = vmatprep.subr.bf16.mxu0 0
    %805 = vmatpush1.bf16.msra.mxu0 %v593
    %806 = vmatprep.subr.bf16.mxu0 0
    %807 = vmatpush1.bf16.msra.mxu0 %v592
    %808 = vmatprep.subr.bf16.mxu0 0
    %809 = vmatpush2.bf16.msra.mxu0 %v607
    %810 = vmatprep.subr.bf16.mxu0 0
    %811 = vmatpush2.bf16.msra.mxu0 %v606
    %812 = vmatprep.subr.bf16.mxu0 0
    %813 = vmatpush2.bf16.msra.mxu0 %v605
    %814 = vmatprep.subr.bf16.mxu0 0
    %815 = vmatpush2.bf16.msra.mxu0 %v604
    %816 = vmatprep.subr.bf16.mxu0 0
    %817 = vmatpush2.bf16.msra.mxu0 %v603
    %818 = vmatprep.subr.bf16.mxu0 0
    %819 = vmatpush2.bf16.msra.mxu0 %v602
    %820 = vmatprep.subr.bf16.mxu0 0
    %821 = vmatpush2.bf16.msra.mxu0 %v601
    %822 = vmatprep.subr.bf16.mxu0 0
    %823 = vmatpush2.bf16.msra.mxu0 %v600
    %824 = vmatprep.mubr.bf16.mxu0 %v144
    %825 = vmatmul.mubr.bf16.gmra.mxu0 %v143
    %v826 = vpop.f32.mrf.mxu0
    %v827 = vadd.f32 %v787, %v826
    %v828 = vpop.f32.mrf.mxu0
    %v829 = vpop.f32.mrf.mxu0
    %v830 = vpop.f32.mrf.mxu0
    %831 = vdwg.mxu0
    %vm832 = vcmp.eq.s32.totalorder %v273, 1
    %v833 = vsel %vm832, 1, 0
    %v834 = vcvt.s32.f32 %v833
    %836 = vset.pattern.permute.xlu0 0
    %837 = vperm.xlu0 %836, %v834
    %v838 = vpop.permute.xlu0 %837
    %v840 = vlaneseq
    %v841 = vshrl.u32 %v840, 7
    %v842 = vsub.s32 1, %v841
    %v843 = vrot.slane %v274, %v842
    %v844 = vmul.f32 %v838, %v843
    %v845 = vadd.f32 %v827, %v844
    %vm846 = vcmp.eq.s32.totalorder %v273, 2
    %v847 = vsel %vm846, 1, 0
    %v848 = vcvt.s32.f32 %v847
    %850 = vset.pattern.permute.xlu0 0
    %851 = vperm.xlu0 %850, %v848
    %v852 = vpop.permute.xlu0 %851
    %v854 = vlaneseq
    %v855 = vshrl.u32 %v854, 7
    %v856 = vsub.s32 2, %v855
    %v857 = vrot.slane %v274, %v856
    %v858 = vmul.f32 %v852, %v857
    %v859 = vadd.f32 %v845, %v858
    %vm860 = vcmp.eq.s32.totalorder %v273, 3
    %v861 = vsel %vm860, 1, 0
    %v862 = vcvt.s32.f32 %v861
    %864 = vset.pattern.permute.xlu0 0
    %865 = vperm.xlu0 %864, %v862
    %v866 = vpop.permute.xlu0 %865
    %v868 = vlaneseq
    %v869 = vshrl.u32 %v868, 7
    %v870 = vsub.s32 3, %v869
    %v871 = vrot.slane %v274, %v870
    %v872 = vmul.f32 %v866, %v871
    %v873 = vadd.f32 %v859, %v872
    %v874 = vld [vmem:[%s4] sm:$0x1]
    %v876 = vlaneseq
    %v877 = vshrl.u32 %v876, 7
    %v878 = vsub.s32 0, %v877
    %v879 = vrot.slane %v874, %v878
    %v881 = vadd.f32 %v873, %v879
    %v882 = vmax.f32 %v881, 0.0
    %v883 = vpack.c.bf16 %v882, %v882
    %v884 = vld [vmem:[%s5] sm:$0xf]
    %v885 = vld [vmem:[%s5 + $0x4] sm:$0xf]
    %v886 = vld [vmem:[%s5 + $0x8] sm:$0xf]
    %v887 = vld [vmem:[%s5 + $0xc] sm:$0xf]
    %v888 = vld [vmem:[%s5 + $0x10] sm:$0xf]
    %v889 = vld [vmem:[%s5 + $0x14] sm:$0xf]
    %v890 = vld [vmem:[%s5 + $0x18] sm:$0xf]
    %v891 = vld [vmem:[%s5 + $0x1c] sm:$0xf]
    %v892 = vld [vmem:[%s5 + $0x20] sm:$0xf]
    %v893 = vld [vmem:[%s5 + $0x24] sm:$0xf]
    %v894 = vld [vmem:[%s5 + $0x28] sm:$0xf]
    %v895 = vld [vmem:[%s5 + $0x2c] sm:$0xf]
    %v896 = vld [vmem:[%s5 + $0x30] sm:$0xf]
    %v897 = vld [vmem:[%s5 + $0x34] sm:$0xf]
    %v898 = vld [vmem:[%s5 + $0x38] sm:$0xf]
    %v899 = vld [vmem:[%s5 + $0x3c] sm:$0xf]
    %v900 = vld [vmem:[%s6] sm:$0x1]
    %v902 = vlaneseq
    %v903 = vshrl.u32 %v902, 7
    %v904 = vsub.s32 0, %v903
    %v905 = vrot.slane %v900, %v904
    %v923 = vunpack.c.l.b16 %v884
    %v924 = vunpack.c.l.b16 %v885
    %v925 = vunpack.c.l.b16 %v886
    %v926 = vunpack.c.l.b16 %v887
    %v927 = vunpack.c.l.b16 %v888
    %v928 = vunpack.c.l.b16 %v889
    %v929 = vunpack.c.l.b16 %v890
    %v930 = vunpack.c.l.b16 %v891
    %v931 = vunpack.c.l.b16 %v892
    %v932 = vunpack.c.l.b16 %v893
    %v933 = vunpack.c.l.b16 %v894
    %v934 = vunpack.c.l.b16 %v895
    %v935 = vunpack.c.l.b16 %v896
    %v936 = vunpack.c.l.b16 %v897
    %v937 = vunpack.c.l.b16 %v898
    %v938 = vunpack.c.l.b16 %v899
    %v939 = vpack.c.b16 %v924, %v923
    %v940 = vpack.c.b16 %v926, %v925
    %v941 = vpack.c.b16 %v928, %v927
    %v942 = vpack.c.b16 %v930, %v929
    %v943 = vpack.c.b16 %v932, %v931
    %v944 = vpack.c.b16 %v934, %v933
    %v945 = vpack.c.b16 %v936, %v935
    %v946 = vpack.c.b16 %v938, %v937
    %955 = vmatprep.subr.bf16.mxu0 0
    %956 = vmatpush1.bf16.msra.mxu0 %v946
    %957 = vmatprep.subr.bf16.mxu0 0
    %958 = vmatpush1.bf16.msra.mxu0 %v945
    %959 = vmatprep.subr.bf16.mxu0 0
    %960 = vmatpush1.bf16.msra.mxu0 %v944
    %961 = vmatprep.subr.bf16.mxu0 0
    %962 = vmatpush1.bf16.msra.mxu0 %v943
    %963 = vmatprep.subr.bf16.mxu0 0
    %964 = vmatpush1.bf16.msra.mxu0 %v942
    %965 = vmatprep.subr.bf16.mxu0 0
    %966 = vmatpush1.bf16.msra.mxu0 %v941
    %967 = vmatprep.subr.bf16.mxu0 0
    %968 = vmatpush1.bf16.msra.mxu0 %v940
    %969 = vmatprep.subr.bf16.mxu0 0
    %970 = vmatpush1.bf16.msra.mxu0 %v939
    %971 = vmatprep.subr.bf16.mxu0 0
    %972 = vmatpush2.bf16.msra.mxu0 0
    %973 = vmatprep.subr.bf16.mxu0 0
    %974 = vmatpush2.bf16.msra.mxu0 0
    %975 = vmatprep.subr.bf16.mxu0 0
    %976 = vmatpush2.bf16.msra.mxu0 0
    %977 = vmatprep.subr.bf16.mxu0 0
    %978 = vmatpush2.bf16.msra.mxu0 0
    %979 = vmatprep.subr.bf16.mxu0 0
    %980 = vmatpush2.bf16.msra.mxu0 0
    %981 = vmatprep.subr.bf16.mxu0 0
    %982 = vmatpush2.bf16.msra.mxu0 0
    %983 = vmatprep.subr.bf16.mxu0 0
    %984 = vmatpush2.bf16.msra.mxu0 0
    %985 = vmatprep.subr.bf16.mxu0 0
    %986 = vmatpush2.bf16.msra.mxu0 0
    %987 = vmatprep.mubr.bf16.mxu0 0
    %988 = vmatmul.mubr.bf16.gmra.mxu0 %v883
    %v989 = vpop.f32.mrf.mxu0
    %v990 = vadd.f32 %v905, %v989
    %v991 = vpop.f32.mrf.mxu0
    %v992 = vpop.f32.mrf.mxu0
    %v993 = vpop.f32.mrf.mxu0
    %994 = vdwg.mxu0
    %995 = vst [vmem:[#allocation4] sm:$0xff] %v990
    // Predicated region
    $region34: #{agent_simple_forward.1} parent=1 // pred_check
      _
    $region35: #{agent_simple_forward.1} parent=1 // pred_check_branch
      %997 = sbr.rel (0) target = $region37
    $region36: #{agent_simple_forward.1} parent=1 // pred_region
      // Predicated region
      $region38: #{agent_simple_forward.1} parent=36 // pred_check
        _
      $region39: #{agent_simple_forward.1} parent=36 // pred_check_branch
        %999 = sbr.rel (0) target = $region41
      $region40: #{agent_simple_forward.1} parent=36 // pred_region
        // Predicated region
        $region42: #{agent_simple_forward.1} parent=40 // pred_check
          _
        $region43: #{agent_simple_forward.1} parent=40 // pred_check_branch
          %1001 = sbr.rel target = $region45
        $region44: #{agent_simple_forward.1} parent=40 // pred_region
          // Predicated region
          $region57: #{agent_simple_forward.1} parent=44 // pred_check
            _
          $region58: #{agent_simple_forward.1} parent=44 // pred_check_branch
            %1017 = sbr.rel (0) target = $region60
          $region59: #{agent_simple_forward.1} parent=44 // pred_region
            %s1019 = ssub.s32 4, 1
            loop: start=0, step=1, limit=1
            $region61: #{agent_simple_forward.1} parent=59 // loop_pre_header
              _
            $region62: #{agent_simple_forward.1} parent=59 // loop_header
              %s1021 = sphi 0, %s1025
              %p1022 = scmp.ge.s32.totalorder %s1021, 1
              %s1026 = sphi [#allocation4], [#allocation4]
              %s1027 = sphi %s7, %s7
            $region63: #{agent_simple_forward.1} parent=59 // loop_header_branch
              %1024 = sbr.rel (%p1022) target = $region67
            $region64: #{agent_simple_forward.1} parent=59 // loop_body
              %v1028 = vld [vmem:[%s1026] sm:%s1019]
              %1029 = vst [vmem:[%s1027] sm:%s1019] %v1028
            $region65: #{agent_simple_forward.1} parent=59 // loop_footer
              %s1025 = sadd.s32 1, %s1021
            $region66: #{agent_simple_forward.1} parent=59 // loop_footer_branch
              %1020 = sbr.rel target = $region62
            $region67: #{agent_simple_forward.1} parent=59 // loop_exit
              _
          $region60: #{agent_simple_forward.1} parent=44 // pred_fallthru
            _
        $region45: #{agent_simple_forward.1} parent=40 // pred_fallthru
          _
        // Predicated region
        $region46: #{agent_simple_forward.1} parent=40 // pred_check
          _
        $region47: #{agent_simple_forward.1} parent=40 // pred_check_branch
          %1003 = sbr.rel (0) target = $region49
        $region48: #{agent_simple_forward.1} parent=40 // pred_region
          %s1005 = ssub.s32 4, 1
          loop: start=0, step=1, limit=1
          $region50: #{agent_simple_forward.1} parent=48 // loop_pre_header
            _
          $region51: #{agent_simple_forward.1} parent=48 // loop_header
            %s1007 = sphi 0, %s1011
            %p1008 = scmp.ge.s32.totalorder %s1007, 1
            %s1012 = sphi [#allocation4], [#allocation4]
            %s1013 = sphi %s7, %s7
          $region52: #{agent_simple_forward.1} parent=48 // loop_header_branch
            %1010 = sbr.rel (%p1008) target = $region56
          $region53: #{agent_simple_forward.1} parent=48 // loop_body
            %v1014 = vld [vmem:[%s1012] sm:%s1005]
            %1015 = vst [vmem:[%s1013] sm:%s1005] %v1014
          $region54: #{agent_simple_forward.1} parent=48 // loop_footer
            %s1011 = sadd.s32 1, %s1007
          $region55: #{agent_simple_forward.1} parent=48 // loop_footer_branch
            %1006 = sbr.rel target = $region51
          $region56: #{agent_simple_forward.1} parent=48 // loop_exit
            _
        $region49: #{agent_simple_forward.1} parent=40 // pred_fallthru
          _
      $region41: #{agent_simple_forward.1} parent=36 // pred_fallthru
        _
      %1030 = vnop
    $region37: #{agent_simple_forward.1} parent=1 // pred_fallthru
      _
    // Predicated region
    $region68: #{agent_simple_forward.1} parent=1 // pred_check
      _
    $region69: #{agent_simple_forward.1} parent=1 // pred_check_branch
      %1032 = sbr.rel (0) target = $region71
    $region70: #{agent_simple_forward.1} parent=1 // pred_region
      _
    $region71: #{agent_simple_forward.1} parent=1 // pred_fallthru
      _
    %1033 = vsyncpa [#allocation3], 1

</llo_original>
